<compile_context>
chip_gen: v5e
topology: v5e:2x2
jax: 0.10.0
libtpu: 0.0.40
codegen_flags: <defaults>
</compile_context>

<pallas_src>
import jax
import jax.numpy as jnp
from jax.experimental import pallas as pl
from jax.experimental.pallas import tpu as pltpu


def cxam_kernel(x_ref, w_ref, b_ref, o_ref):
    # x_ref: (C, N) for the current batch element (leading batch dim squeezed)
    # w_ref: (C + 2*Cq, C)  fused [Wv; Wq; Wk]
    # b_ref: (C + 2*Cq, 1)  fused [bv; bq; bk]
    x = x_ref[...]
    C = o_ref.shape[0]
    Cq = (w_ref.shape[0] - C) // 2

    # One fused, lane-dense (C+2Cq, N) projection matmul on the MXU.
    qvk = jnp.dot(w_ref[...], x, preferred_element_type=jnp.float32) + b_ref[...]
    v = qvk[:C]                 # (C,  N)  value projection
    q = qvk[C:C + Cq]           # (Cq, N)  query projection
    k = qvk[C + Cq:]            # (Cq, N)  key projection

    # AdaptiveAvgPool2d(1) over keys commutes with the bmm:
    #   mean_j (q_n . k_j) = q_n . mean_j(k_j)
    kbar = jnp.mean(k, axis=-1, keepdims=True)            # (Cq, 1) cross-lane reduce
    logit = jnp.sum(q * kbar, axis=0, keepdims=True)       # (1,  N) tiny sublane reduce
    attn = jax.nn.sigmoid(logit)                            # (1,  N)

    # out = proj_value * attention_R (broadcast over channels/sublanes)
    o_ref[...] = (v * attn).astype(o_ref.dtype)


def cxam_forward(x_nchw, params):
    B, C, W, H = x_nchw.shape
    N = W * H
    Cq = params["wq"].shape[0]

    # NCHW -> (B, C, N): pure view, position index n = w*H + h, matching the
    # PyTorch .view(B, -1, W*H) flatten. No transposes needed.
    x = x_nchw.reshape(B, C, N)
    dt = x.dtype

    wv = params["wv"].reshape(C, C)
    wq = params["wq"].reshape(Cq, C)
    wk = params["wk"].reshape(Cq, C)
    # Fused projection weights/biases: [value; query; key].
    # (For v6e/v7x, cast w_all and x to bfloat16 here; accumulation stays f32.)
    w_all = jnp.concatenate([wv, wq, wk], axis=0).astype(dt)            # (C+2Cq, C)
    b_all = jnp.concatenate(
        [params["bv"], params["bq"], params["bk"]]
    ).reshape(C + 2 * Cq, 1).astype(jnp.float32)                        # (C+2Cq, 1)

    itemsize = jnp.dtype(dt).itemsize
    cost = pl.CostEstimate(
        flops=int(B * (2 * N * C * (C + 2 * Cq) + 4 * N * Cq + 2 * N * C)),
        transcendentals=int(B * N),
        bytes_accessed=int(2 * B * C * N * itemsize
                           + w_all.size * itemsize + b_all.size * 4),
    )

    # Per-step VMEM = 2x double-buffered (C, N) in + out tiles + resident
    # weights; for realistic detector maps (e.g. C=256, N=64*64) this is a few
    # MiB, comfortably inside the 32 MiB scoped default on v6e/v7x.
    out = pl.pallas_call(
        cxam_kernel,
        out_shape=jax.ShapeDtypeStruct((B, C, N), dt),
        grid_spec=pltpu.PrefetchScalarGridSpec(
            num_scalar_prefetch=0,
            grid=(B,),
            in_specs=[
                pl.BlockSpec((None, C, N), lambda b: (b, 0, 0)),       # x (batch squeezed)
                pl.BlockSpec((C + 2 * Cq, C), lambda b: (0, 0)),        # fused weights (resident)
                pl.BlockSpec((C + 2 * Cq, 1), lambda b: (0, 0)),        # fused biases  (resident)
            ],
            out_specs=pl.BlockSpec((None, C, N), lambda b: (b, 0, 0)),
        ),
        compiler_params=pltpu.CompilerParams(dimension_semantics=("parallel",)),
        cost_estimate=cost,
    )(x, w_all, b_all)

    return out.reshape(B, C, W, H)


def cxam_reference(x, params):
    """Pure-JAX mirror of the PyTorch forward (NCHW), for correctness check."""
    B, C, W, H = x.shape
    N = W * H
    Cq = params["wq"].shape[0]

    def conv1x1(t, w, b):
        return jnp.einsum("bchw,oc->bohw", t, w.reshape(w.shape[0], C)) + b.reshape(1, -1, 1, 1)

    proj_query = conv1x1(x, params["wq"], params["bq"]).reshape(B, Cq, N).transpose(0, 2, 1)
    proj_key = conv1x1(x, params["wk"], params["bk"]).reshape(B, Cq, N)
    R = jnp.einsum("bnc,bcm->bnm", proj_query, proj_key).reshape(B, N, W, H)
    attention_R = jax.nn.sigmoid(jnp.mean(R, axis=(2, 3)).reshape(B, 1, W, H))
    proj_value = conv1x1(x, params["wv"], params["bv"])
    return proj_value * attention_R


if __name__ == "__main__":
    B, C, W, H = 2, 32, 16, 16       # in_channels = out_channels = 32, N = 256 (lane-dense)
    reduction = 8
    Cq = C // reduction              # = 4

    key = jax.random.PRNGKey(0)
    ks = jax.random.split(key, 7)
    x = jax.random.normal(ks[0], (B, C, W, H), jnp.float32)
    params = {
        "wq": 0.1 * jax.random.normal(ks[1], (Cq, C, 1, 1), jnp.float32),
        "bq": 0.1 * jax.random.normal(ks[2], (Cq,), jnp.float32),
        "wk": 0.1 * jax.random.normal(ks[3], (Cq, C, 1, 1), jnp.float32),
        "bk": 0.1 * jax.random.normal(ks[4], (Cq,), jnp.float32),
        "wv": 0.1 * jax.random.normal(ks[5], (C, C, 1, 1), jnp.float32),
        "bv": 0.1 * jax.random.normal(ks[6], (C,), jnp.float32),
    }

    out = jax.block_until_ready(cxam_forward(x, params))
    ref = cxam_reference(x, params)

    assert out.shape == (B, C, W, H), out.shape
    assert jnp.allclose(out, ref, atol=1e-4, rtol=1e-4), float(jnp.max(jnp.abs(out - ref)))
    print("KERNEL_OK")
</pallas_src>

<mosaic_0001>
module attributes {stable_mosaic.version = 11 : i64} {
  func.func @cxam_kernel(%arg0: i32, %arg1: memref<1x32x256xf32, #tpu.memory_space<vmem>>, %arg2: memref<40x32xf32, #tpu.memory_space<vmem>>, %arg3: memref<40x1xf32, #tpu.memory_space<vmem>>, %arg4: memref<1x32x256xf32, #tpu.memory_space<vmem>>) attributes {dimension_semantics = [#tpu.dimension_semantics<parallel>], iteration_bounds = array<i64: 2>, scalar_prefetch = 0 : i64, scratch_operands = 0 : i64, tpu.core_type = #tpu.core_type<tc>, window_params = [{transform_indices = @transform_0, window_bounds = array<i64: 1, 32, 256>}, {pipeline_mode = #tpu.pipeline_mode<synchronous>, transform_indices = @transform_1, window_bounds = array<i64: 40, 32>}, {pipeline_mode = #tpu.pipeline_mode<synchronous>, transform_indices = @transform_2, window_bounds = array<i64: 40, 1>}, {transform_indices = @transform_3, window_bounds = array<i64: 1, 32, 256>}]} {
    %c0 = arith.constant 0 : index
    %c0_0 = arith.constant 0 : index
    %c0_1 = arith.constant 0 : index
    %0 = vector.load %arg1[%c0, %c0_0, %c0_1] : memref<1x32x256xf32, #tpu.memory_space<vmem>>, vector<1x32x256xf32>
    %1 = vector.shape_cast %0 : vector<1x32x256xf32> to vector<32x256xf32>
    %c0_2 = arith.constant 0 : index
    %c0_3 = arith.constant 0 : index
    %2 = vector.load %arg2[%c0_2, %c0_3] : memref<40x32xf32, #tpu.memory_space<vmem>>, vector<40x32xf32>
    %cst = arith.constant dense<0.000000e+00> : vector<40x256xf32>
    %3 = tpu.matmul %2, %1, %cst {dimension_numbers = #tpu.dot_dimension_numbers<[1], [0], [0], [1], [0, 0, 1, 1], [], []>} : vector<40x32xf32>, vector<32x256xf32>, vector<40x256xf32> -> vector<40x256xf32>
    %c0_4 = arith.constant 0 : index
    %c0_5 = arith.constant 0 : index
    %4 = vector.load %arg3[%c0_4, %c0_5] : memref<40x1xf32, #tpu.memory_space<vmem>>, vector<40x1xf32>
    %5 = vector.broadcast %4 : vector<40x1xf32> to vector<40x256xf32>
    %6 = arith.addf %3, %5 : vector<40x256xf32>
    %7 = vector.extract_strided_slice %6 {offsets = [0, 0], sizes = [32, 256], strides = [1, 1]} : vector<40x256xf32> to vector<32x256xf32>
    %8 = vector.extract_strided_slice %6 {offsets = [32, 0], sizes = [4, 256], strides = [1, 1]} : vector<40x256xf32> to vector<4x256xf32>
    %9 = vector.extract_strided_slice %6 {offsets = [36, 0], sizes = [4, 256], strides = [1, 1]} : vector<40x256xf32> to vector<4x256xf32>
    %cst_6 = arith.constant dense<0.000000e+00> : vector<4xf32>
    %10 = vector.multi_reduction <add>, %9, %cst_6 [1] : vector<4x256xf32> to vector<4xf32>
    %11 = vector.shape_cast %10 : vector<4xf32> to vector<4x1xf32>
    %cst_7 = arith.constant 2.560000e+02 : f32
    %12 = vector.broadcast %cst_7 : f32 to vector<4x1xf32>
    %13 = arith.divf %11, %12 : vector<4x1xf32>
    %14 = vector.broadcast %13 : vector<4x1xf32> to vector<4x256xf32>
    %15 = arith.mulf %8, %14 : vector<4x256xf32>
    %cst_8 = arith.constant dense<0.000000e+00> : vector<256xf32>
    %16 = vector.multi_reduction <add>, %15, %cst_8 [0] : vector<4x256xf32> to vector<256xf32>
    %17 = vector.shape_cast %16 : vector<256xf32> to vector<1x256xf32>
    %18 = arith.negf %17 : vector<1x256xf32>
    %19 = math.exp %18 : vector<1x256xf32>
    %cst_9 = arith.constant 1.000000e+00 : f32
    %20 = vector.broadcast %cst_9 : f32 to vector<1x256xf32>
    %21 = arith.addf %20, %19 : vector<1x256xf32>
    %22 = arith.divf %20, %21 : vector<1x256xf32>
    %23 = vector.broadcast %22 : vector<1x256xf32> to vector<32x256xf32>
    %24 = arith.mulf %7, %23 : vector<32x256xf32>
    %c0_10 = arith.constant 0 : index
    %c0_11 = arith.constant 0 : index
    %c0_12 = arith.constant 0 : index
    %25 = vector.load %arg4[%c0_10, %c0_11, %c0_12] : memref<1x32x256xf32, #tpu.memory_space<vmem>>, vector<1x32x256xf32>
    %26 = vector.shape_cast %25 : vector<1x32x256xf32> to vector<32x256xf32>
    %27 = vector.shape_cast %24 : vector<32x256xf32> to vector<1x32x256xf32>
    tpu.vector_store %arg4[%c0_10, %c0_11, %c0_12], %27 {strides = array<i32>} : memref<1x32x256xf32, #tpu.memory_space<vmem>>, vector<1x32x256xf32>,
    return
  }
  func.func @transform_0(%arg0: i32) -> (i32, i32, i32) {
    %c0_i32 = arith.constant 0 : i32
    %c0_i32_0 = arith.constant 0 : i32
    %c0_i32_1 = arith.constant 0 : i32
    return %arg0, %c0_i32, %c0_i32_0 : i32, i32, i32
  }
  func.func @transform_1(%arg0: i32) -> (i32, i32) {
    %c0_i32 = arith.constant 0 : i32
    %c0_i32_0 = arith.constant 0 : i32
    %c0_i32_1 = arith.constant 0 : i32
    return %c0_i32, %c0_i32_0 : i32, i32
  }
  func.func @transform_2(%arg0: i32) -> (i32, i32) {
    %c0_i32 = arith.constant 0 : i32
    %c0_i32_0 = arith.constant 0 : i32
    %c0_i32_1 = arith.constant 0 : i32
    return %c0_i32, %c0_i32_0 : i32, i32
  }
  func.func @transform_3(%arg0: i32) -> (i32, i32, i32) {
    %c0_i32 = arith.constant 0 : i32
    %c0_i32_0 = arith.constant 0 : i32
    %c0_i32_1 = arith.constant 0 : i32
    return %arg0, %c0_i32, %c0_i32_0 : i32, i32, i32
  }
}

</mosaic_0001>

<llo_original>
// kernel: tpu_custom_call.1
$region0: #{tpu_custom_call.1}
  #allocation0 [shape = 'u32[]', space=smem, size = 0x4, offset = 0x4, fixed_abs, tag = 'smem constant byte address 0x4 - core index']
  #allocation1 [shape = 'u32[72,128]{1,0:T(1,128)}', space=vmem, size = 0x9000, scoped, tag = 'internal scratch']
  %s0 = inlined_call_operand.hbm [shape: f32[2,32,256], index: 0, kind: input, shape index: {}]
  %s1 = inlined_call_operand.vmem [shape: f32[40,32], index: 1, kind: input, shape index: {}]
  %s2 = inlined_call_operand.vmem [shape: f32[40,1], index: 2, kind: input, shape index: {}]
  %s3 = inlined_call_operand.hbm [shape: f32[2,32,256], index: 3, kind: output, shape index: {}]
  %s4 = sld [smem:[#allocation0]]
  $region49: #{tpu_custom_call.1} parent=0
    _
  %s6 = ssub.s32 1, %s4
  %s7 = scalar_select 0, %s6, %s4
  $region1: #{tpu_custom_call.1} parent=0
    #allocation2 [shape = 'u8[65536]{0}', space=vmem, size = 0x10000, scoped, tag = 'input window, operand 0']
    #allocation3 [shape = 's32[2]{0}', space=sflag, size = 0x8, scoped, tag = 'scoped memory for tpu_custom_call.1']
    #allocation4 [shape = 's32[2]{0}', space=sflag, size = 0x8, scoped, tag = 'scoped memory for tpu_custom_call.1']
    #allocation5 [shape = 'u8[65536]{0}', space=vmem, size = 0x10000, scoped, tag = 'output window, operand 0']
    %8 = vsyncpa [#allocation3], 0
    %s9 = scalar_lea.sflag [#allocation3], 1
    %10 = vsyncpa %s9, 0
    %11 = vsyncpa [#allocation4], 0
    %s12 = scalar_lea.sflag [#allocation4], 1
    %13 = vsyncpa %s12, 0
    loop: start=0, step=1, limit=4
    $region2: #{tpu_custom_call.1} parent=1 // loop_pre_header
      _
    $region3: #{tpu_custom_call.1} parent=1 // loop_header
      %s15 = sphi 0, %s19
      %p16 = scmp.ge.s32.totalorder %s15, 4
      %s25 = sphi 0, %s27
      %s28 = sphi 0, %s25
      %s29 = sphi 0, %s28
      %s45 = sphi 0, %s29
      %s49 = sphi 0, %s49
      %s51 = sphi 0, %s49
      %s52 = sphi 0, %s51
      %s66 = sphi 0, %s52
      %s70 = sphi 0, %s70
      %s72 = sphi 0, %s70
      %s73 = sphi 0, %s72
      %s87 = sphi 0, %s73
      %s93 = sphi 0, %s95
      %s96 = sphi 0, %s93
      %s97 = sphi 0, %s96
      %s113 = sphi 0, %s97
    $region4: #{tpu_custom_call.1} parent=1 // loop_header_branch
      %18 = sbr.rel (%p16) target = $region8
    $region5: #{tpu_custom_call.1} parent=1 // loop_body
      %s20 = ssub.s32 %s15, 1
      %s21 = ssub.s32 %s15, 2
      %s22 = sadd.s32 %s15, 1
      %s23 = ssub.s32 %s15, %s22
      %p24 = scmp.eq.s32.totalorder %s23, 0
      %s26 = sadd.s32 %s25, 1
      %s27 = scalar_select %p24, %s25, %s26
      %p30 = pneg %p24
      %p31 = scmp.eq.s32.totalorder %s15, 1
      %p32 = por %p30, %p31
      %p33 = scmp.ne.s32.totalorder %s25, %s28
      %p34 = scmp.eq.s32.totalorder %s15, 0
      %p35 = por %p33, %p34
      %p36 = scmp.ne.s32.totalorder %s25, %s28
      %p37 = scmp.eq.s32.totalorder %s20, 1
      %p38 = por %p36, %p37
      %p39 = scmp.ne.s32.totalorder %s28, %s29
      %p40 = scmp.eq.s32.totalorder %s20, 0
      %p41 = por %p39, %p40
      %p42 = scmp.ne.s32.totalorder %s28, %s29
      %p43 = scmp.eq.s32.totalorder %s21, 1
      %p44 = por %p42, %p43
      %p46 = scmp.ne.s32.totalorder %s29, %s45
      %p47 = scmp.eq.s32.totalorder %s21, 0
      %p48 = por %p46, %p47
      %s50 = sadd.s32 %s49, 1
      %p53 = scmp.eq.s32.totalorder %s15, 1
      %p54 = scmp.ne.s32.totalorder %s49, %s51
      %p55 = scmp.eq.s32.totalorder %s15, 0
      %p56 = por %p54, %p55
      %p57 = scmp.ne.s32.totalorder %s49, %s51
      %p58 = scmp.eq.s32.totalorder %s20, 1
      %p59 = por %p57, %p58
      %p60 = scmp.ne.s32.totalorder %s51, %s52
      %p61 = scmp.eq.s32.totalorder %s20, 0
      %p62 = por %p60, %p61
      %p63 = scmp.ne.s32.totalorder %s51, %s52
      %p64 = scmp.eq.s32.totalorder %s21, 1
      %p65 = por %p63, %p64
      %p67 = scmp.ne.s32.totalorder %s52, %s66
      %p68 = scmp.eq.s32.totalorder %s21, 0
      %p69 = por %p67, %p68
      %s71 = sadd.s32 %s70, 1
      %p74 = scmp.eq.s32.totalorder %s15, 1
      %p75 = scmp.ne.s32.totalorder %s70, %s72
      %p76 = scmp.eq.s32.totalorder %s15, 0
      %p77 = por %p75, %p76
      %p78 = scmp.ne.s32.totalorder %s70, %s72
      %p79 = scmp.eq.s32.totalorder %s20, 1
      %p80 = por %p78, %p79
      %p81 = scmp.ne.s32.totalorder %s72, %s73
      %p82 = scmp.eq.s32.totalorder %s20, 0
      %p83 = por %p81, %p82
      %p84 = scmp.ne.s32.totalorder %s72, %s73
      %p85 = scmp.eq.s32.totalorder %s21, 1
      %p86 = por %p84, %p85
      %p88 = scmp.ne.s32.totalorder %s73, %s87
      %p89 = scmp.eq.s32.totalorder %s21, 0
      %p90 = por %p88, %p89
      %s91 = ssub.s32 %s15, %s22
      %p92 = scmp.eq.s32.totalorder %s91, 0
      %s94 = sadd.s32 %s93, 1
      %s95 = scalar_select %p92, %s93, %s94
      %p98 = pneg %p92
      %p99 = scmp.eq.s32.totalorder %s15, 1
      %p100 = por %p98, %p99
      %p101 = scmp.ne.s32.totalorder %s93, %s96
      %p102 = scmp.eq.s32.totalorder %s15, 0
      %p103 = por %p101, %p102
      %p104 = scmp.ne.s32.totalorder %s93, %s96
      %p105 = scmp.eq.s32.totalorder %s20, 1
      %p106 = por %p104, %p105
      %p107 = scmp.ne.s32.totalorder %s96, %s97
      %p108 = scmp.eq.s32.totalorder %s20, 0
      %p109 = por %p107, %p108
      %p110 = scmp.ne.s32.totalorder %s96, %s97
      %p111 = scmp.eq.s32.totalorder %s21, 1
      %p112 = por %p110, %p111
      %p114 = scmp.ne.s32.totalorder %s97, %s113
      %p115 = scmp.eq.s32.totalorder %s21, 0
      %p116 = por %p114, %p115
      %p117 = scmp.le.s32.totalorder 1, %s15
      %p118 = scmp.lt.s32.totalorder %s15, 3
      %p119 = pnand %p117, %p118
      %p120 = pneg %p119
      // Predicated region
      $region9: #{tpu_custom_call.1} parent=5 // pred_check
        _
      $region10: #{tpu_custom_call.1} parent=5 // pred_check_branch
        %122 = sbr.rel (%p119) target = $region12
      $region11: #{tpu_custom_call.1} parent=5 // pred_region
        %s123 = ssub.s32 %s15, 1
        // Predicated region
        $region13: #{tpu_custom_call.1} parent=11 // pred_check
          %p124 = pneg %p62
        $region14: #{tpu_custom_call.1} parent=11 // pred_check_branch
          %126 = sbr.rel (%p124) target = $region16
        $region15: #{tpu_custom_call.1} parent=11 // pred_region
          _
        $region16: #{tpu_custom_call.1} parent=11 // pred_fallthru
          _
        // Predicated region
        $region17: #{tpu_custom_call.1} parent=11 // pred_check
          %p127 = pneg %p83
        $region18: #{tpu_custom_call.1} parent=11 // pred_check_branch
          %129 = sbr.rel (%p127) target = $region20
        $region19: #{tpu_custom_call.1} parent=11 // pred_region
          _
        $region20: #{tpu_custom_call.1} parent=11 // pred_fallthru
          _
      $region12: #{tpu_custom_call.1} parent=5 // pred_fallthru
        _
      %p130 = scmp.lt.s32.totalorder %s15, 2
      // Predicated region
      $region21: #{tpu_custom_call.1} parent=5 // pred_check
        %p131 = pneg %p130
      $region22: #{tpu_custom_call.1} parent=5 // pred_check_branch
        %133 = sbr.rel (%p131) target = $region24
      $region23: #{tpu_custom_call.1} parent=5 // pred_region
        // Predicated region
        $region25: #{tpu_custom_call.1} parent=23 // pred_check
          %p134 = pneg %p35
        $region26: #{tpu_custom_call.1} parent=23 // pred_check_branch
          %136 = sbr.rel (%p134) target = $region28
        $region27: #{tpu_custom_call.1} parent=23 // pred_region
          %s137 = sand.u32 %s25, 1
          %s138 = scalar_lea.sflag [#allocation3], %s137
          %s139 = sand.u32 %s25, 1
          %s140 = smul.addr %s139, 64
          %s141 = scalar_lea.vmem [#allocation2], %s140
          %143 = vsyncadd %s138, 0
          %s144 = smul.addr %s15, 8
          %s145 = smul.addr %s144, 8
          %s146 = scalar_lea.hbm %s0, %s145
          %s147 = sshll.u32 %s146, 4
          %s148 = int_to_ptr.hbm [resolvable:$true] %s147
          %s149 = sshll.u32 %s141, 4
          %s150 = int_to_ptr.vmem [resolvable:$true] %s149
          %155 = dma.hbm_to_vmem [thread:$0]  %s148, 1024, %s150, %s138, 256, 256, 16
        $region28: #{tpu_custom_call.1} parent=23 // pred_fallthru
          _
      $region24: #{tpu_custom_call.1} parent=5 // pred_fallthru
        _
      %p156 = scmp.le.s32.totalorder 1, %s15
      %p157 = scmp.lt.s32.totalorder %s15, 3
      %p158 = pnand %p156, %p157
      %p159 = pneg %p158
      // Predicated region
      $region29: #{tpu_custom_call.1} parent=5 // pred_check
        _
      $region30: #{tpu_custom_call.1} parent=5 // pred_check_branch
        %161 = sbr.rel (%p158) target = $region32
      $region31: #{tpu_custom_call.1} parent=5 // pred_region
        %s162 = ssub.s32 %s15, 1
        %s163 = sand.u32 %s28, 1
        %s164 = scalar_lea.sflag [#allocation3], %s163
        %s165 = sand.u32 %s28, 1
        %s166 = smul.addr %s165, 64
        %s167 = scalar_lea.vmem [#allocation2], %s166
        // Predicated region
        $region33: #{tpu_custom_call.1} parent=31 // pred_check
          %p168 = pneg %p41
        $region34: #{tpu_custom_call.1} parent=31 // pred_check_branch
          %170 = sbr.rel (%p168) target = $region36
        $region35: #{tpu_custom_call.1} parent=31 // pred_region
          %172 = dma.done %s164, 1024
        $region36: #{tpu_custom_call.1} parent=31 // pred_fallthru
          _
        %s173 = sand.u32 %s28, 1
        %s174 = scalar_lea.sflag [#allocation3], %s173
        %s175 = sand.u32 %s28, 1
        %s176 = smul.addr %s175, 64
        %s177 = scalar_lea.vmem [#allocation2], %s176
        %p178 = pneg %p41
        %p179 = pneg %p38
        %p180 = pneg %p62
        %p181 = pneg %p59
        %p182 = pneg %p83
        %p183 = pneg %p80
        %p184 = pneg %p109
        %p185 = pneg %p106
        %s186 = sand.u32 %s96, 1
        %s187 = scalar_lea.sflag [#allocation4], %s186
        %s188 = sand.u32 %s96, 1
        %s189 = smul.addr %s188, 64
        %s190 = scalar_lea.vmem [#allocation5], %s189
        %v191 = vld [vmem:[%s167] sm:$0xff]
        %v192 = vld [vmem:[%s167 + $0x8] sm:$0xff]
        %v193 = vld [vmem:[%s167 + $0x10] sm:$0xff]
        %v194 = vld [vmem:[%s167 + $0x18] sm:$0xff]
        %v195 = vld [vmem:[%s167 + $0x20] sm:$0xff]
        %v196 = vld [vmem:[%s167 + $0x28] sm:$0xff]
        %v197 = vld [vmem:[%s167 + $0x30] sm:$0xff]
        %v198 = vld [vmem:[%s167 + $0x38] sm:$0xff]
        %v199 = vld [vmem:[%s1] sm:$0xff]
        %v200 = vld [vmem:[%s1 + $0x8] sm:$0xff]
        %v201 = vld [vmem:[%s1 + $0x10] sm:$0xff]
        %v202 = vld [vmem:[%s1 + $0x18] sm:$0xff]
        %v203 = vld [vmem:[%s1 + $0x20] sm:$0xff]
        %v204 = vld [vmem:[%s2] sm:$0xff]
        %v205 = vld [vmem:[%s2 + $0x8] sm:$0xff]
        %v206 = vld [vmem:[%s2 + $0x10] sm:$0xff]
        %v207 = vld [vmem:[%s2 + $0x18] sm:$0xff]
        %v208 = vld [vmem:[%s2 + $0x20] sm:$0xff]
        %210 = vset.pattern.permute.xlu0 0
        %211 = vperm.xlu0 %210, %v204
        %v212 = vpop.permute.xlu0 %211
        %215 = vset.pattern.permute.xlu0 0
        %216 = vperm.xlu0 %215, %v205
        %v217 = vpop.permute.xlu0 %216
        %220 = vset.pattern.permute.xlu0 0
        %221 = vperm.xlu0 %220, %v206
        %v222 = vpop.permute.xlu0 %221
        %225 = vset.pattern.permute.xlu0 0
        %226 = vperm.xlu0 %225, %v207
        %v227 = vpop.permute.xlu0 %226
        %230 = vset.pattern.permute.xlu0 0
        %231 = vperm.xlu0 %230, %v208
        %v232 = vpop.permute.xlu0 %231
        %vm234 = vcmask 261120
        %v236 = vsel %vm234, %v199, 0
        %v239 = vsel %vm234, %v200, 0
        %v242 = vsel %vm234, %v201, 0
        %v245 = vsel %vm234, %v202, 0
        %v248 = vsel %vm234, %v203, 0
        %250 = vmatpush.msra.mxu0 0.0
        %251 = vmatpush.msra.mxu0 0.0
        %252 = vmatpush.msra.mxu0 0.0
        %253 = vmatpush.msra.mxu0 0.0
        %254 = vmatpush.msra.mxu0 0.0
        %255 = vmatpush.msra.mxu0 0.0
        %256 = vmatpush.msra.mxu0 0.0
        %257 = vmatpush.msra.mxu0 0.0
        %258 = vmatpush.msra.mxu0 0.0
        %259 = vmatpush.msra.mxu0 0.0
        %260 = vmatpush.msra.mxu0 0.0
        %261 = vmatpush.msra.mxu0 0.0
        %262 = vmatpush.msra.mxu0 %v197
        %263 = vmatpush.msra.mxu0 %v195
        %264 = vmatpush.msra.mxu0 %v193
        %265 = vmatpush.msra.mxu0 %v191
        %266 = vmatmul.f32.gmra.mxu0 %v236
        %v267 = vpop.f32.mrf.mxu0
        %v268 = vadd.f32 %v212, %v267
        %269 = vmatmul.f32.gmra.mxu0 %v239
        %v270 = vpop.f32.mrf.mxu0
        %v271 = vadd.f32 %v217, %v270
        %272 = vmatmul.f32.gmra.mxu0 %v242
        %v273 = vpop.f32.mrf.mxu0
        %v274 = vadd.f32 %v222, %v273
        %275 = vmatmul.f32.gmra.mxu0 %v245
        %v276 = vpop.f32.mrf.mxu0
        %v277 = vadd.f32 %v227, %v276
        %278 = vmatmul.f32.gmra.mxu0 %v248
        %v279 = vpop.f32.mrf.mxu0
        %v280 = vadd.f32 %v232, %v279
        %281 = vdwg.mxu0
        %282 = vmatpush.msra.mxu0 0.0
        %283 = vmatpush.msra.mxu0 0.0
        %284 = vmatpush.msra.mxu0 0.0
        %285 = vmatpush.msra.mxu0 0.0
        %286 = vmatpush.msra.mxu0 0.0
        %287 = vmatpush.msra.mxu0 0.0
        %288 = vmatpush.msra.mxu0 0.0
        %289 = vmatpush.msra.mxu0 0.0
        %290 = vmatpush.msra.mxu0 0.0
        %291 = vmatpush.msra.mxu0 0.0
        %292 = vmatpush.msra.mxu0 0.0
        %293 = vmatpush.msra.mxu0 0.0
        %294 = vmatpush.msra.mxu0 %v198
        %295 = vmatpush.msra.mxu0 %v196
        %296 = vmatpush.msra.mxu0 %v194
        %297 = vmatpush.msra.mxu0 %v192
        %298 = vmatmul.f32.gmra.mxu0 %v236
        %v299 = vpop.f32.mrf.mxu0
        %v300 = vadd.f32 %v212, %v299
        %301 = vmatmul.f32.gmra.mxu0 %v239
        %v302 = vpop.f32.mrf.mxu0
        %v303 = vadd.f32 %v217, %v302
        %304 = vmatmul.f32.gmra.mxu0 %v242
        %v305 = vpop.f32.mrf.mxu0
        %v306 = vadd.f32 %v222, %v305
        %307 = vmatmul.f32.gmra.mxu0 %v245
        %v308 = vpop.f32.mrf.mxu0
        %v309 = vadd.f32 %v227, %v308
        %310 = vmatmul.f32.gmra.mxu0 %v248
        %v311 = vpop.f32.mrf.mxu0
        %v312 = vadd.f32 %v232, %v311
        %313 = vdwg.mxu0
        %vm314 = vcmask 1047556
        %v315 = vsel %vm314, %v280, 0.0
        %v316 = vsel %vm314, %v312, 0.0
        %v317 = vadd.f32 %v315, %v316
        %318 = vadd.xlane.f32.xlu0 %v317
        %v319 = vpop.xlane.xlu0 %318
        %v320 = vrcp.pop 256.0
        %v321 = vmul.f32 256.0, %v320
        %v322 = vsub.f32 1.0, %v321
        %v323 = vmul.f32 %v320, %v322
        %v324 = vadd.f32 %v320, %v323
        %vm325 = vweird.f32 %v320
        %v326 = vsel %vm325, %v320, %v324
        %v327 = vmul.f32 %v319, %v326
        %v329 = vrot.slane %v327, 4
        %v331 = vmul.f32 %v280, %v329
        %v332 = vmul.f32 %v312, %v329
        %vm333 = vcmask 1043456
        %v334 = vsel %vm333, %v331, 0.0
        %v335 = vrot.slane %v334, 4
        %v336 = vadd.f32 %v334, %v335
        %v337 = vrot.slane %v336, 2
        %v338 = vadd.f32 %v336, %v337
        %v339 = vrot.slane %v338, 1
        %v340 = vadd.f32 %v338, %v339
        %v341 = vsel %vm333, %v332, 0.0
        %v342 = vrot.slane %v341, 4
        %v343 = vadd.f32 %v341, %v342
        %v344 = vrot.slane %v343, 2
        %v345 = vadd.f32 %v343, %v344
        %v346 = vrot.slane %v345, 1
        %v347 = vadd.f32 %v345, %v346
        %v348 = vxor.u32 %v340, 2147483648
        %v349 = vxor.u32 %v347, 2147483648
        %v350 = vmul.f32 %v348, 1.442695
        %v351 = vpow.pop %v350
        %v352 = vmul.f32 %v349, 1.442695
        %v353 = vpow.pop %v352
        %v354 = vadd.f32 %v351, 1.0
        %v355 = vadd.f32 %v353, 1.0
        %v356 = vrcp.pop %v354
        %v357 = vmul.f32 %v354, %v356
        %v358 = vsub.f32 1.0, %v357
        %v359 = vmul.f32 %v356, %v358
        %v360 = vadd.f32 %v356, %v359
        %vm361 = vweird.f32 %v354
        %vm362 = vweird.f32 %v356
        %vm363 = vmor %vm361, %vm362
        %v364 = vsel %vm363, %v356, %v360
        %v365 = vand.u32 2147483647, %v354
        %vm366 = vcmp.eq.f32.partialorder %v365, 8.507059e+37
        %v367 = vand.u32 %v354, 2147483648
        %v368 = vor.u32 1.1754944e-38, %v367
        %v369 = vsel %vm366, %v368, %v364
        %v370 = vmul.f32 1.0, %v369
        %v371 = vrcp.pop %v355
        %v372 = vmul.f32 %v355, %v371
        %v373 = vsub.f32 1.0, %v372
        %v374 = vmul.f32 %v371, %v373
        %v375 = vadd.f32 %v371, %v374
        %vm376 = vweird.f32 %v355
        %vm377 = vweird.f32 %v371
        %vm378 = vmor %vm376, %vm377
        %v379 = vsel %vm378, %v371, %v375
        %v380 = vand.u32 2147483647, %v355
        %vm381 = vcmp.eq.f32.partialorder %v380, 8.507059e+37
        %v382 = vand.u32 %v355, 2147483648
        %v383 = vor.u32 1.1754944e-38, %v382
        %v384 = vsel %vm381, %v383, %v379
        %v385 = vmul.f32 1.0, %v384
        %v386 = vmul.f32 %v268, %v370
        %v387 = vmul.f32 %v300, %v385
        %v388 = vmul.f32 %v271, %v370
        %v389 = vmul.f32 %v303, %v385
        %v390 = vmul.f32 %v274, %v370
        %v391 = vmul.f32 %v306, %v385
        %v392 = vmul.f32 %v277, %v370
        %v393 = vmul.f32 %v309, %v385
        %394 = vst [vmem:[%s190] sm:$0xff] %v386
        %395 = vst [vmem:[%s190 + $0x8] sm:$0xff] %v387
        %396 = vst [vmem:[%s190 + $0x10] sm:$0xff] %v388
        %397 = vst [vmem:[%s190 + $0x18] sm:$0xff] %v389
        %398 = vst [vmem:[%s190 + $0x20] sm:$0xff] %v390
        %399 = vst [vmem:[%s190 + $0x28] sm:$0xff] %v391
        %400 = vst [vmem:[%s190 + $0x30] sm:$0xff] %v392
        %401 = vst [vmem:[%s190 + $0x38] sm:$0xff] %v393
        %s402 = sand.u32 %s96, 1
        %s403 = scalar_lea.sflag [#allocation4], %s402
        %s404 = sand.u32 %s96, 1
        %s405 = smul.addr %s404, 64
        %s406 = scalar_lea.vmem [#allocation5], %s405
        // Predicated region
        $region37: #{tpu_custom_call.1} parent=31 // pred_check
          %p407 = pneg %p106
        $region38: #{tpu_custom_call.1} parent=31 // pred_check_branch
          %409 = sbr.rel (%p407) target = $region40
        $region39: #{tpu_custom_call.1} parent=31 // pred_region
          %411 = vsyncadd %s403, 0
          %s412 = smul.addr %s20, 8
          %s413 = smul.addr %s412, 8
          %s414 = scalar_lea.hbm %s3, %s413
          %s415 = sshll.u32 %s406, 4
          %s416 = int_to_ptr.vmem [resolvable:$true] %s415
          %s417 = sshll.u32 %s414, 4
          %s418 = int_to_ptr.hbm [resolvable:$true] %s417
          %423 = dma.vmem_to_hbm [thread:$0]  %s416, 1024, %s418, %s403, 256, 256, 16
        $region40: #{tpu_custom_call.1} parent=31 // pred_fallthru
          _
      $region32: #{tpu_custom_call.1} parent=5 // pred_fallthru
        _
      %p424 = scmp.le.s32.totalorder 2, %s15
      // Predicated region
      $region41: #{tpu_custom_call.1} parent=5 // pred_check
        %p425 = pneg %p424
      $region42: #{tpu_custom_call.1} parent=5 // pred_check_branch
        %427 = sbr.rel (%p425) target = $region44
      $region43: #{tpu_custom_call.1} parent=5 // pred_region
        %s428 = ssub.s32 %s15, 2
        // Predicated region
        $region45: #{tpu_custom_call.1} parent=43 // pred_check
          %p429 = pneg %p112
        $region46: #{tpu_custom_call.1} parent=43 // pred_check_branch
          %431 = sbr.rel (%p429) target = $region48
        $region47: #{tpu_custom_call.1} parent=43 // pred_region
          %s432 = sand.u32 %s97, 1
          %s433 = scalar_lea.sflag [#allocation4], %s432
          %s434 = sand.u32 %s97, 1
          %s435 = smul.addr %s434, 64
          %s436 = scalar_lea.vmem [#allocation5], %s435
          %438 = dma.done %s433, 1024
        $region48: #{tpu_custom_call.1} parent=43 // pred_fallthru
          _
      $region44: #{tpu_custom_call.1} parent=5 // pred_fallthru
        _
    $region6: #{tpu_custom_call.1} parent=1 // loop_footer
      %s19 = sadd.s32 1, %s15
    $region7: #{tpu_custom_call.1} parent=1 // loop_footer_branch
      %14 = sbr.rel target = $region3
    $region8: #{tpu_custom_call.1} parent=1 // loop_exit
      _
    %439 = vsyncpa [#allocation3], 1
    %s440 = scalar_lea.sflag [#allocation3], 1
    %441 = vsyncpa %s440, 1
    %442 = vsyncpa [#allocation4], 1
    %s443 = scalar_lea.sflag [#allocation4], 1
    %444 = vsyncpa %s443, 1

</llo_original>
